<compile_context>
chip_gen: v5e
topology: v5e:2x2
jax: 0.10.0
libtpu: 0.0.40
codegen_flags: <defaults>
</compile_context>

<pallas_src>
import math

import jax
import jax.numpy as jnp
from jax.experimental import pallas as pl
from jax.experimental.pallas import tpu as pltpu


_LANE = 128                     # lane width (last dim of every block)
_VMEM_BUDGET = 12 * 1024 * 1024  # double-buffered working-set budget (v5e-safe)
_BLOCK_BYTES_MAX = 2 * 1024 * 1024  # ~2 MiB per input block (85%+ HBM roofline)


def _sublane(dtype):
    """Native sublane tile for the dtype: 8 (32-bit), 16 (bf16), 32 (int8/fp8)."""
    bits = jnp.dtype(dtype).itemsize * 8
    return max(8, 256 // bits)


def _make_sum_kernel(n, weighted):
    """Kernel body for `n` stacked inputs (+optional f32 SMEM coefficients)."""
    if weighted:
        def kernel(coeff_ref, *refs):
            # refs = (x0, x1, ..., x_{n-1}, out); coeff_ref: SMEM f32[n-1]
            o_ref = refs[n]
            acc = refs[0][...].astype(jnp.float32)      # x[0] is never scaled
            for i in range(1, n):
                # f32 scalar coeff -> multiply/accumulate in f32 (VPU has slack)
                acc = acc + refs[i][...].astype(jnp.float32) * coeff_ref[i - 1]
            o_ref[...] = acc.astype(o_ref.dtype)
    else:
        def kernel(*refs):
            o_ref = refs[n]
            acc = refs[0][...]
            for i in range(1, n):
                acc = acc + refs[i][...]
            o_ref[...] = acc.astype(o_ref.dtype)
    return kernel


@jax.jit
def sum_forward(xs, w=None):
    """xs: list of n identically-shaped arrays; w: optional (n-1,) f32 weights."""
    n = len(xs)
    if n == 1:
        return xs[0]

    shape = xs[0].shape
    dtype = xs[0].dtype
    weighted = w is not None
    total = math.prod(shape)
    itemsize = jnp.dtype(dtype).itemsize
    sub = _sublane(dtype)

    # ---- lane-dense (M, 128) view; pad only to the SUB*128 reshape boundary --
    boundary = sub * _LANE
    rem = total % boundary
    total_pad = total if rem == 0 else total + (boundary - rem)
    M = total_pad // _LANE

    blocks = []
    for xi in xs:
        f = xi.reshape(-1)
        if total_pad != total:
            # TODO(synk): if this pad ever dominates, route it through XLA
            # input fusion (allow_input_fusion) instead of a standalone copy.
            f = jnp.pad(f, (0, total_pad - total))
        blocks.append(f.reshape(M, _LANE))

    # ---- row-tile size ------------------------------------------------------
    tm_max_rows = _BLOCK_BYTES_MAX // (_LANE * itemsize)          # ~2 MiB blocks
    budget_rows = _VMEM_BUDGET // (2 * (n + 1) * _LANE * itemsize)
    tm_cap = max(sub, min(tm_max_rows, (budget_rows // sub) * sub))

    total_bytes = M * _LANE * itemsize
    # >=2 grid steps for >1 MiB problems so the v7x megacore split is live.
    min_steps = 2 if total_bytes > (1 << 20) else 1
    tm_target = -(-M // min_steps)
    tm_target = -(-tm_target // sub) * sub
    tm = max(sub, min(tm_cap, tm_target))
    grid = (pl.cdiv(M, tm),)          # ragged final block is masked by Pallas

    # Explicit scoped-VMEM limit with headroom (working set <= ~12 MiB budget).
    working = 2 * (n + 1) * tm * _LANE * itemsize
    vmem_limit = int(min(32 << 20, max(16 << 20, 2 * working)))

    x_spec = pl.BlockSpec((tm, _LANE), lambda i: (i, 0))
    in_specs = [x_spec] * n
    args = list(blocks)
    if weighted:
        # Keep coefficients in f32 (SMEM scalars are natively 32-bit).
        coeffs = (jax.nn.sigmoid(w) * 2.0).astype(jnp.float32)
        in_specs = [pl.BlockSpec(memory_space=pltpu.MemorySpace.SMEM)] + in_specs
        args = [coeffs] + args

    out = pl.pallas_call(
        _make_sum_kernel(n, weighted),
        out_shape=jax.ShapeDtypeStruct((M, _LANE), dtype),
        grid=grid,
        in_specs=in_specs,
        out_specs=pl.BlockSpec((tm, _LANE), lambda i: (i, 0)),
        compiler_params=pltpu.CompilerParams(
            dimension_semantics=("parallel",),
            vmem_limit_bytes=vmem_limit,
        ),
    )(*args)

    y = out.reshape(-1)
    if total_pad != total:
        y = y[:total]
    return y.reshape(shape)


def _reference(xs, w=None):
    y = xs[0]
    if w is not None:
        c = jax.nn.sigmoid(w) * 2.0
        for i in range(len(xs) - 1):
            y = y + xs[i + 1] * c[i]
    else:
        for i in range(len(xs) - 1):
            y = y + xs[i + 1]
    return y


if __name__ == "__main__":
    # Module hyper-params: Sum(n=3) over small NCHW feature maps.
    n = 3
    N, C, H, W = 2, 4, 16, 16

    key = jax.random.PRNGKey(0)
    keys = jax.random.split(key, n)
    xs = [jax.random.normal(k, (N, C, H, W), dtype=jnp.float32) for k in keys]

    # PyTorch init: self.w = -torch.arange(1., n) / 2  -> shape (n-1,)
    w = -jnp.arange(1.0, float(n)) / 2.0

    # weighted variant (weight=True)
    out_w = jax.block_until_ready(sum_forward(xs, w))
    # unweighted variant (weight=False)
    out_u = jax.block_until_ready(sum_forward(xs, None))

    ref_w = _reference(xs, w)
    ref_u = _reference(xs, None)

    assert out_w.shape == (N, C, H, W)
    assert out_u.shape == (N, C, H, W)
    assert jnp.allclose(out_w, ref_w, atol=1e-6, rtol=1e-6), "weighted Sum mismatch"
    assert jnp.allclose(out_u, ref_u, atol=1e-6, rtol=1e-6), "unweighted Sum mismatch"

    print("KERNEL_OK")
</pallas_src>

<mosaic_0001>
module attributes {stable_mosaic.version = 11 : i64} {
  func.func @kernel(%arg0: i32, %arg1: memref<2xf32, #tpu.memory_space<smem>>, %arg2: memref<16x128xf32, #tpu.memory_space<vmem>>, %arg3: memref<16x128xf32, #tpu.memory_space<vmem>>, %arg4: memref<16x128xf32, #tpu.memory_space<vmem>>, %arg5: memref<16x128xf32, #tpu.memory_space<vmem>>) attributes {dimension_semantics = [#tpu.dimension_semantics<parallel>], iteration_bounds = array<i64: 1>, scalar_prefetch = 0 : i64, scratch_operands = 0 : i64, tpu.core_type = #tpu.core_type<tc>, window_params = [{transform_indices = @transform_0, window_bounds = array<i64: 2>}, {transform_indices = @transform_1, window_bounds = array<i64: 16, 128>}, {transform_indices = @transform_2, window_bounds = array<i64: 16, 128>}, {transform_indices = @transform_3, window_bounds = array<i64: 16, 128>}, {transform_indices = @transform_4, window_bounds = array<i64: 16, 128>}]} {
    %c0 = arith.constant 0 : index
    %c0_0 = arith.constant 0 : index
    %0 = vector.load %arg2[%c0, %c0_0] : memref<16x128xf32, #tpu.memory_space<vmem>>, vector<16x128xf32>
    %c0_1 = arith.constant 0 : index
    %c0_2 = arith.constant 0 : index
    %1 = vector.load %arg3[%c0_1, %c0_2] : memref<16x128xf32, #tpu.memory_space<vmem>>, vector<16x128xf32>
    %c0_3 = arith.constant 0 : index
    %2 = memref.load %arg1[%c0_3] : memref<2xf32, #tpu.memory_space<smem>>
    %3 = vector.broadcast %2 : f32 to vector<16x128xf32>
    %4 = arith.mulf %1, %3 : vector<16x128xf32>
    %5 = arith.addf %0, %4 : vector<16x128xf32>
    %c0_4 = arith.constant 0 : index
    %c0_5 = arith.constant 0 : index
    %6 = vector.load %arg4[%c0_4, %c0_5] : memref<16x128xf32, #tpu.memory_space<vmem>>, vector<16x128xf32>
    %c1 = arith.constant 1 : index
    %7 = memref.load %arg1[%c1] : memref<2xf32, #tpu.memory_space<smem>>
    %8 = vector.broadcast %7 : f32 to vector<16x128xf32>
    %9 = arith.mulf %6, %8 : vector<16x128xf32>
    %10 = arith.addf %5, %9 : vector<16x128xf32>
    %c0_6 = arith.constant 0 : index
    %c0_7 = arith.constant 0 : index
    %11 = vector.load %arg5[%c0_6, %c0_7] : memref<16x128xf32, #tpu.memory_space<vmem>>, vector<16x128xf32>
    tpu.vector_store %arg5[%c0_6, %c0_7], %10 {strides = array<i32>} : memref<16x128xf32, #tpu.memory_space<vmem>>, vector<16x128xf32>,
    return
  }
  func.func @transform_0(%arg0: i32) -> i32 {
    %c0_i32 = arith.constant 0 : i32
    %c0_i32_0 = arith.constant 0 : i32
    return %c0_i32 : i32
  }
  func.func @transform_1(%arg0: i32) -> (i32, i32) {
    %c0_i32 = arith.constant 0 : i32
    %c0_i32_0 = arith.constant 0 : i32
    return %arg0, %c0_i32 : i32, i32
  }
  func.func @transform_2(%arg0: i32) -> (i32, i32) {
    %c0_i32 = arith.constant 0 : i32
    %c0_i32_0 = arith.constant 0 : i32
    return %arg0, %c0_i32 : i32, i32
  }
  func.func @transform_3(%arg0: i32) -> (i32, i32) {
    %c0_i32 = arith.constant 0 : i32
    %c0_i32_0 = arith.constant 0 : i32
    return %arg0, %c0_i32 : i32, i32
  }
  func.func @transform_4(%arg0: i32) -> (i32, i32) {
    %c0_i32 = arith.constant 0 : i32
    %c0_i32_0 = arith.constant 0 : i32
    return %arg0, %c0_i32 : i32, i32
  }
}

</mosaic_0001>

<llo_original>
// kernel: sum_forward.1
$region0: #{sum_forward.1}
  #allocation0 [shape = 'u32[]', space=smem, size = 0x4, offset = 0x4, fixed_abs, tag = 'smem constant byte address 0x4 - core index']
  #allocation1 [shape = 'u32[72,128]{1,0:T(1,128)}', space=vmem, size = 0x9000, scoped, tag = 'internal scratch']
  %s0 = inlined_call_operand.vmem [shape: f32[2], index: 0, kind: input, shape index: {}]
  %s1 = inlined_call_operand.vmem [shape: f32[16,128], index: 1, kind: input, shape index: {}]
  %s2 = inlined_call_operand.vmem [shape: f32[16,128], index: 2, kind: input, shape index: {}]
  %s3 = inlined_call_operand.vmem [shape: f32[16,128], index: 3, kind: input, shape index: {}]
  %s4 = inlined_call_operand.vmem [shape: f32[16,128], index: 4, kind: output, shape index: {}]
  %s5 = sld [smem:[#allocation0]]
  $region30: #{sum_forward.1} parent=0
    _
  %s7 = ssub.s32 1, %s5
  %s8 = scalar_select 0, %s7, %s5
  $region1: #{sum_forward.1} parent=0
    #allocation2 [shape = 'u8[512]{0}', space=smem, size = 0x200, scoped, tag = 'input window, operand 0, single buffered']
    #allocation3 [shape = 's32[1]{0}', space=sflag, size = 0x4, scoped, tag = 'scoped memory for sum_forward.1']
    %9 = vsyncpa [#allocation3], 0
    // Predicated region
    $region2: #{sum_forward.1} parent=1 // pred_check
      _
    $region3: #{sum_forward.1} parent=1 // pred_check_branch
      %11 = sbr.rel (0) target = $region5
    $region4: #{sum_forward.1} parent=1 // pred_region
      %13 = vsyncadd [#allocation3], 0
      %s15 = sshll.u32 %s0, 4
      %s16 = int_to_ptr.vmem [resolvable:$true] %s15
      %18 = dma.vmem_to_smem %s16, 16, [#allocation2], [#allocation3]
    $region5: #{sum_forward.1} parent=1 // pred_fallthru
      _
    // Predicated region
    $region6: #{sum_forward.1} parent=1 // pred_check
      _
    $region7: #{sum_forward.1} parent=1 // pred_check_branch
      %20 = sbr.rel (0) target = $region9
    $region8: #{sum_forward.1} parent=1 // pred_region
      _
    $region9: #{sum_forward.1} parent=1 // pred_fallthru
      _
    // Predicated region
    $region10: #{sum_forward.1} parent=1 // pred_check
      _
    $region11: #{sum_forward.1} parent=1 // pred_check_branch
      %22 = sbr.rel (0) target = $region13
    $region12: #{sum_forward.1} parent=1 // pred_region
      _
    $region13: #{sum_forward.1} parent=1 // pred_fallthru
      _
    // Predicated region
    $region14: #{sum_forward.1} parent=1 // pred_check
      _
    $region15: #{sum_forward.1} parent=1 // pred_check_branch
      %24 = sbr.rel (0) target = $region17
    $region16: #{sum_forward.1} parent=1 // pred_region
      _
    $region17: #{sum_forward.1} parent=1 // pred_fallthru
      _
    // Predicated region
    $region18: #{sum_forward.1} parent=1 // pred_check
      _
    $region19: #{sum_forward.1} parent=1 // pred_check_branch
      %26 = sbr.rel (0) target = $region21
    $region20: #{sum_forward.1} parent=1 // pred_region
      %28 = dma.done [#allocation3], 16
    $region21: #{sum_forward.1} parent=1 // pred_fallthru
      _
    %29 = sfence
    %v30 = vld [vmem:[%s1] sm:$0xff]
    %v31 = vld [vmem:[%s1 + $0x8] sm:$0xff]
    %v32 = vld [vmem:[%s2] sm:$0xff]
    %v33 = vld [vmem:[%s2 + $0x8] sm:$0xff]
    %s34 = sld [smem:[#allocation2]]
    %v35 = vstv %s34
    %v36 = vmul.f32 %v32, %v35
    %v37 = vmul.f32 %v33, %v35
    %v38 = vadd.f32 %v30, %v36
    %v39 = vadd.f32 %v31, %v37
    %v40 = vld [vmem:[%s3] sm:$0xff]
    %v41 = vld [vmem:[%s3 + $0x8] sm:$0xff]
    %s42 = sld [smem:[#allocation2 + $0x1]]
    %v43 = vstv %s42
    %v44 = vmul.f32 %v40, %v43
    %v45 = vmul.f32 %v41, %v43
    %v46 = vadd.f32 %v38, %v44
    %v47 = vadd.f32 %v39, %v45
    %48 = vst [vmem:[%s4] sm:$0xff] %v46
    %49 = vst [vmem:[%s4 + $0x8] sm:$0xff] %v47
    // Predicated region
    $region22: #{sum_forward.1} parent=1 // pred_check
      _
    $region23: #{sum_forward.1} parent=1 // pred_check_branch
      %51 = sbr.rel (0) target = $region25
    $region24: #{sum_forward.1} parent=1 // pred_region
      _
    $region25: #{sum_forward.1} parent=1 // pred_fallthru
      _
    // Predicated region
    $region26: #{sum_forward.1} parent=1 // pred_check
      _
    $region27: #{sum_forward.1} parent=1 // pred_check_branch
      %53 = sbr.rel (0) target = $region29
    $region28: #{sum_forward.1} parent=1 // pred_region
      _
    $region29: #{sum_forward.1} parent=1 // pred_fallthru
      _
    %54 = vsyncpa [#allocation3], 1

</llo_original>
